<compile_context>
chip_gen: v7x
topology: tpu7x:2x2x1
jax: 0.10.0
libtpu: 0.0.40
codegen_flags: <defaults>
</compile_context>

<pallas_src>
import jax
import jax.numpy as jnp
from jax.experimental import pallas as pl
from jax.experimental.pallas import tpu as pltpu

_LANE = 128
_LANE_WIDTHS = (4096, 2048, 1024, 512, 256, 128)   # preferred lane-dense widths


def _round_up(x: int, m: int) -> int:
    return ((x + m - 1) // m) * m


def _sublane_multiple(dtype) -> int:
    """Minimum row multiple so packed tiles stay aligned: f32->8, bf16->16, i8->32."""
    itemsize = jnp.dtype(dtype).itemsize
    packing = max(1, 4 // itemsize)
    return 8 * packing


def _vmem_capacity_bytes() -> int:
    """Generation-aware physical VMEM query with a conservative (v7x) fallback."""
    try:
        return int(pltpu.get_tpu_info().vmem_capacity_bytes)
    except Exception:
        return 64 * 1024 * 1024


def _sigmoid_round_kernel(x_ref, o_ref):
    # EUP exp + VPU round; fully hidden behind the HBM DMAs.
    o_ref[...] = jnp.round(jax.nn.sigmoid(x_ref[...]))


def _run_2d(mat: jax.Array) -> jax.Array:
    """Run the kernel over a (rows, width) lane-dense slab (width % 128 == 0)."""
    rows, width = mat.shape
    itemsize = jnp.dtype(mat.dtype).itemsize
    sub = _sublane_multiple(mat.dtype)

    vmem_cap = _vmem_capacity_bytes()
    # ~8 MiB blocks; 4x block (double-buffered in+out) stays <= half of VMEM.
    target_block_bytes = min(8 * 1024 * 1024, vmem_cap // 8)
    vmem_limit = min(48 * 1024 * 1024, (vmem_cap * 3) // 4)

    row_bytes = width * itemsize
    block_rows = max(target_block_bytes // row_bytes, sub)
    block_rows = (block_rows // sub) * sub           # dtype-aware sublane align

    if rows <= sub:
        block_rows = rows                            # full extent: always legal
    else:
        # Cap at ~half the rows so the grid has >= 2 steps and both v7x
        # TensorCores stream (no-op once the slab is large enough that the
        # byte-based block size already yields many steps).
        cap = _round_up(pl.cdiv(rows, 2), sub)
        block_rows = min(block_rows, cap)

    grid = (pl.cdiv(rows, block_rows),)

    n_elems = rows * width
    cost = pl.CostEstimate(
        flops=n_elems,                          # the rounds
        transcendentals=n_elems,                # the sigmoid exps
        bytes_accessed=2 * n_elems * itemsize,  # 1 read + 1 write
    )

    return pl.pallas_call(
        _sigmoid_round_kernel,
        out_shape=jax.ShapeDtypeStruct(mat.shape, mat.dtype),
        grid_spec=pltpu.PrefetchScalarGridSpec(
            num_scalar_prefetch=0,
            grid=grid,
            in_specs=[pl.BlockSpec((block_rows, width), lambda i: (i, 0))],
            out_specs=pl.BlockSpec((block_rows, width), lambda i: (i, 0)),
        ),
        compiler_params=pltpu.CompilerParams(
            dimension_semantics=("parallel",),
            vmem_limit_bytes=vmem_limit,
        ),
        cost_estimate=cost,
    )(mat)


@jax.jit
def output_fn(x: jax.Array) -> jax.Array:
    """round(sigmoid(x)), elementwise, any shape / float dtype."""
    orig_shape = x.shape
    flat = x.reshape(-1)
    n = flat.shape[0]

    if n < _LANE:
        # Tiny input: kernel launch not worth it.
        return jnp.round(jax.nn.sigmoid(x))

    # 128-aligned prefix -> kernel (exactly 1 read + 1 write).
    n_main = (n // _LANE) * _LANE
    width = next(w for w in _LANE_WIDTHS if n_main % w == 0)

    main = _run_2d(flat[:n_main].reshape(-1, width))

    if n_main == n:
        return main.reshape(orig_shape)

    # Rare ragged tail (numel % 128 != 0): <128 elements via XLA.  The
    # concatenate costs one extra pass over the data for these shapes only.
    tail = jnp.round(jax.nn.sigmoid(flat[n_main:]))
    return jnp.concatenate([main.reshape(-1), tail]).reshape(orig_shape)


if __name__ == "__main__":
    key = jax.random.PRNGKey(0)

    # 1) Small NCHW-style input consistent with the module's image-like usage.
    x = jax.random.normal(key, (2, 4, 16, 16), dtype=jnp.float32)
    y = jax.block_until_ready(output_fn(x))
    assert y.shape == x.shape and y.dtype == x.dtype
    assert bool(jnp.all(y == jnp.round(jax.nn.sigmoid(x))))

    # 2) Larger f32 input: exercises the multi-block (grid >= 2) path.
    x2 = jax.random.normal(jax.random.PRNGKey(1), (8, 64, 64, 64), dtype=jnp.float32)
    y2 = jax.block_until_ready(output_fn(x2))
    assert bool(jnp.all(y2 == jnp.round(jax.nn.sigmoid(x2))))

    # 3) bf16 multi-block path (exercises 16-row sublane alignment).  Inputs
    #    are kept >= 0.05 away from 0 so a 1-ULP sigmoid difference between
    #    lowerings cannot flip rounding of values landing exactly on 0.5.
    x3 = jax.random.normal(jax.random.PRNGKey(2), (4, 8, 64, 128), dtype=jnp.float32)
    x3 = (jnp.sign(x3) * (jnp.abs(x3) + 0.05)).astype(jnp.bfloat16)
    y3 = jax.block_until_ready(output_fn(x3))
    assert y3.dtype == jnp.bfloat16 and y3.shape == x3.shape
    assert bool(jnp.all(y3 == jnp.round(jax.nn.sigmoid(x3))))

    # 4) Ragged size (numel % 128 != 0): kernel prefix + XLA tail path.
    x4 = jax.random.normal(jax.random.PRNGKey(3), (7, 131), dtype=jnp.float32)
    y4 = jax.block_until_ready(output_fn(x4))
    assert bool(jnp.all(y4 == jnp.round(jax.nn.sigmoid(x4))))

    print("KERNEL_OK")
</pallas_src>

<mosaic_0001>
module attributes {stable_mosaic.version = 11 : i64} {
  func.func @_sigmoid_round_kernel(%arg0: i32, %arg1: memref<1x2048xf32, #tpu.memory_space<vmem>>, %arg2: memref<1x2048xf32, #tpu.memory_space<vmem>>) attributes {dimension_semantics = [#tpu.dimension_semantics<parallel>], iteration_bounds = array<i64: 1>, scalar_prefetch = 0 : i64, scratch_operands = 0 : i64, tpu.core_type = #tpu.core_type<tc>, window_params = [{transform_indices = @transform_0, window_bounds = array<i64: 1, 2048>}, {transform_indices = @transform_1, window_bounds = array<i64: 1, 2048>}]} {
    %c0 = arith.constant 0 : index
    %c0_0 = arith.constant 0 : index
    %0 = vector.load %arg1[%c0, %c0_0] : memref<1x2048xf32, #tpu.memory_space<vmem>>, vector<1x2048xf32>
    %1 = arith.negf %0 : vector<1x2048xf32>
    %2 = math.exp %1 : vector<1x2048xf32>
    %cst = arith.constant 1.000000e+00 : f32
    %3 = vector.broadcast %cst : f32 to vector<1x2048xf32>
    %4 = arith.addf %3, %2 : vector<1x2048xf32>
    %5 = arith.divf %3, %4 : vector<1x2048xf32>
    %6 = math.roundeven %5 : vector<1x2048xf32>
    %c0_1 = arith.constant 0 : index
    %c0_2 = arith.constant 0 : index
    %7 = vector.load %arg2[%c0_1, %c0_2] : memref<1x2048xf32, #tpu.memory_space<vmem>>, vector<1x2048xf32>
    tpu.vector_store %arg2[%c0_1, %c0_2], %6 {strides = array<i32>} : memref<1x2048xf32, #tpu.memory_space<vmem>>, vector<1x2048xf32>,
    return
  }
  func.func @transform_0(%arg0: i32) -> (i32, i32) {
    %c0_i32 = arith.constant 0 : i32
    %c0_i32_0 = arith.constant 0 : i32
    return %arg0, %c0_i32 : i32, i32
  }
  func.func @transform_1(%arg0: i32) -> (i32, i32) {
    %c0_i32 = arith.constant 0 : i32
    %c0_i32_0 = arith.constant 0 : i32
    return %arg0, %c0_i32 : i32, i32
  }
}

</mosaic_0001>

<llo_original>
// kernel: output_fn.1
$region0: #{output_fn.1}
  #allocation0 [shape = 'u32[]', space=smem, size = 0x4, offset = 0x4, fixed_abs, tag = 'smem constant byte address 0x4 - core index']
  #allocation1 [shape = 'u32[144,128]{1,0:T(1,128)}', space=vmem, size = 0x12000, scoped, tag = 'internal scratch']
  %s0 = inlined_call_operand.vmem [shape: f32[1,2048], index: 0, kind: input, shape index: {}]
  %s1 = inlined_call_operand.vmem [shape: f32[1,2048], index: 1, kind: output, shape index: {}]
  %s2 = sld [smem:[#allocation0]]
  $region14: #{output_fn.1} parent=0
    _
  %s4 = ssub.s32 1, %s2
  %s5 = scalar_select 0, %s4, %s2
  // Predicated region
  $region2: #{output_fn.1} parent=0 // pred_check
    _
  $region3: #{output_fn.1} parent=0 // pred_check_branch
    %7 = sbr.rel (0) target = $region5
  $region4: #{output_fn.1} parent=0 // pred_region
    _
  $region5: #{output_fn.1} parent=0 // pred_fallthru
    _
  %v8 = vld [vmem:[%s0] sm:$0xff]
  %v9 = vld [vmem:[%s0 + $0x8] sm:$0xff]
  %v10 = vxor.u32 %v8, 2147483648
  %v11 = vxor.u32 %v9, 2147483648
  %v12 = vmul.f32 %v10, 1.442695
  %v13 = vpow.pop %v12
  %v14 = vmul.f32 %v11, 1.442695
  %v15 = vpow.pop %v14
  %v16 = vadd.f32 %v13, 1.0
  %v17 = vadd.f32 %v15, 1.0
  %v18 = vrcp.pop %v16
  %v19 = vmul.f32 1.0, %v18
  %v20 = vrcp.pop %v17
  %v21 = vmul.f32 1.0, %v20
  %v22 = vround.ne.pseudo %v19
  %v23 = vround.ne.pseudo %v21
  %24 = vst [vmem:[%s1] sm:$0xff] %v22
  %25 = vst [vmem:[%s1 + $0x8] sm:$0xff] %v23
  // Predicated region
  $region6: #{output_fn.1} parent=0 // pred_check
    _
  $region7: #{output_fn.1} parent=0 // pred_check_branch
    %27 = sbr.rel (0) target = $region9
  $region8: #{output_fn.1} parent=0 // pred_region
    _
  $region9: #{output_fn.1} parent=0 // pred_fallthru
    _
  // Predicated region
  $region10: #{output_fn.1} parent=0 // pred_check
    _
  $region11: #{output_fn.1} parent=0 // pred_check_branch
    %29 = sbr.rel (0) target = $region13
  $region12: #{output_fn.1} parent=0 // pred_region
    _
  $region13: #{output_fn.1} parent=0 // pred_fallthru
    _

</llo_original>
